<compile_context>
chip_gen: v6e
topology: v6e:2x2x1
jax: 0.10.0
libtpu: 0.0.40
codegen_flags: <defaults>
</compile_context>

<pallas_src>
import functools

import jax
import jax.numpy as jnp
from jax.experimental import pallas as pl
from jax.experimental.pallas import tpu as pltpu


# ----------------------------------------------------------------------------
# Positional-encoding feature construction (matches _pe_expanded, plain JAX glue).
# Cached: depends only on static shapes / module constants.
# ----------------------------------------------------------------------------
@functools.lru_cache(maxsize=None)
def build_pe_features(nx, ny, nt, modes_x, modes_y, modes_t,
                      max_time_steps, time_exponential_scale):
    gx = jnp.linspace(0.0, 1.0, nx, dtype=jnp.float32)
    gy = jnp.linspace(0.0, 1.0, ny, dtype=jnp.float32)
    gt = jnp.linspace(0.0, 1.0, max_time_steps + 1, dtype=jnp.float32)[1:nt + 1]
    GX, GY, GT = jnp.meshgrid(gx, gy, gt, indexing="ij")
    feats = [GX, GY, GT]
    for i in range(1, modes_x + 1):
        bx = jnp.sin if i % 2 == 0 else jnp.cos
        for j in range(1, modes_y + 1):
            by = jnp.sin if j % 2 == 0 else jnp.cos
            for k in range(1, modes_t + 1):
                bt = jnp.sin if k % 2 == 0 else jnp.cos
                basis = (1.0 / (i * j * k)) \
                    * jnp.exp(time_exponential_scale * GT) \
                    * bx(jnp.pi * i * GX) \
                    * by(jnp.pi * j * GY) \
                    * bt(jnp.pi * k * GT)
                feats.append(basis)
    return jnp.stack(feats)  # (K, nx, ny, nt), K = modes_x*modes_y*modes_t + 3


# ----------------------------------------------------------------------------
# Pallas kernel: for one spatial tile s and batch index b
#   proj = W @ pe_tile + bias   (computed only at b == 0, cached in VMEM scratch)
#   out  = x + proj
# ----------------------------------------------------------------------------
def _pe_proj_add_kernel(x_ref, pe_ref, w_ref, b_ref, o_ref, proj_ref):
    # x_ref/o_ref : (C, tile_s)   pe_ref : (K, tile_s)
    # w_ref : (C, K)              b_ref  : (C, 1)
    # proj_ref : VMEM scratch (C, tile_s) f32, carried across the inner batch axis.
    @pl.when(pl.program_id(1) == 0)
    def _():
        proj_ref[...] = (
            jnp.dot(w_ref[...], pe_ref[...], preferred_element_type=jnp.float32)
            + b_ref[...]
        )
    o_ref[...] = (x_ref[...] + proj_ref[...]).astype(o_ref.dtype)


def _pick_tile_s(S, desired=1024):
    """Largest multiple-of-128 divisor of S that is <= desired, else full S."""
    if S <= desired:
        return S
    if S % 128 == 0:
        t = (desired // 128) * 128
        while t >= 128:
            if S % t == 0:
                return t
            t -= 128
    # Fall back to a single full-extent tile (always layout-legal).
    return S


def pe_proj_add(x_bcs, pe_ks, w_ck, b_c1, *, tile_s=1024):
    """x_bcs: (B, C, S), pe_ks: (K, S), w_ck: (C, K), b_c1: (C, 1)."""
    B, C, S = x_bcs.shape
    K = pe_ks.shape[0]
    tile_s = _pick_tile_s(S, tile_s)
    assert S % tile_s == 0

    grid = (S // tile_s, B)  # spatial outer (parallel), batch inner (arbitrary)
    return pl.pallas_call(
        _pe_proj_add_kernel,
        out_shape=jax.ShapeDtypeStruct((B, C, S), x_bcs.dtype),
        grid_spec=pltpu.PrefetchScalarGridSpec(
            num_scalar_prefetch=0,
            grid=grid,
            in_specs=[
                # Batch dim squeezed out of the kernel Ref -> 2-D (C, tile_s) views.
                pl.BlockSpec((None, C, tile_s), lambda s, b: (b, 0, s)),
                # pe / W / bias index_maps independent of b: no re-fetch across batch.
                pl.BlockSpec((K, tile_s), lambda s, b: (0, s)),
                pl.BlockSpec((C, K), lambda s, b: (0, 0)),
                pl.BlockSpec((C, 1), lambda s, b: (0, 0)),
            ],
            out_specs=pl.BlockSpec((None, C, tile_s), lambda s, b: (b, 0, s)),
            scratch_shapes=[pltpu.VMEM((C, tile_s), jnp.float32)],
        ),
        compiler_params=pltpu.CompilerParams(
            dimension_semantics=("parallel", "arbitrary")),
    )(x_bcs, pe_ks, w_ck, b_c1)


# ----------------------------------------------------------------------------
# Module-equivalent wrapper (all reshapes are contiguous / free — no transposes)
# ----------------------------------------------------------------------------
def space_time_positional_encoding(v, *, modes_x, modes_y, modes_t,
                                   num_channels, max_time_steps,
                                   time_exponential_scale, w_conv, b_conv,
                                   tile_s=1024):
    """v: (B, C, nx, ny, nt) NCDHW (PyTorch convention). Returns same shape."""
    B, C, nx, ny, nt = v.shape
    assert C == num_channels
    assert nt <= max_time_steps, "gridt slice assumes nt <= max_time_steps"
    K = modes_x * modes_y * modes_t + 3
    S = nx * ny * nt

    pe = build_pe_features(nx, ny, nt, modes_x, modes_y, modes_t,
                           max_time_steps, time_exponential_scale)  # (K, nx, ny, nt)
    pe_ks = pe.reshape(K, S)                                         # (K, S)

    # Conv3d(kernel_size=1) weight (C, K, 1, 1, 1) -> (C, K); bias -> (C, 1).
    w_ck = w_conv.reshape(num_channels, K)
    b_c1 = b_conv.reshape(num_channels, 1)

    x_bcs = v.reshape(B, C, S)                                       # channel-first, free
    out_bcs = pe_proj_add(x_bcs, pe_ks, w_ck, b_c1, tile_s=tile_s)
    return out_bcs.reshape(B, C, nx, ny, nt)


# ----------------------------------------------------------------------------
if __name__ == "__main__":
    # Small shapes consistent with the module (spatial_random_feats=True path).
    modes_x, modes_y, modes_t = 4, 4, 2
    num_channels = 8                      # even and > 3
    nx, ny, nt = 16, 16, 8                # S = 2048 -> 2 spatial tiles of 1024
    B = 2
    max_time_steps = 100
    time_exponential_scale = 0.01
    K = modes_x * modes_y * modes_t + 3   # 35

    key = jax.random.PRNGKey(0)
    kv, kw, kb = jax.random.split(key, 3)
    v = jax.random.normal(kv, (B, num_channels, nx, ny, nt), dtype=jnp.float32)
    # Synthetic Conv3d 1x1x1 parameters (shapes as in nn.Conv3d).
    w_conv = 0.1 * jax.random.normal(kw, (num_channels, K, 1, 1, 1), dtype=jnp.float32)
    b_conv = 0.1 * jax.random.normal(kb, (num_channels,), dtype=jnp.float32)

    out = space_time_positional_encoding(
        v, modes_x=modes_x, modes_y=modes_y, modes_t=modes_t,
        num_channels=num_channels, max_time_steps=max_time_steps,
        time_exponential_scale=time_exponential_scale,
        w_conv=w_conv, b_conv=b_conv)
    out = jax.block_until_ready(out)

    # Plain-JAX reference (same math, NCDHW).
    pe_ref = build_pe_features(nx, ny, nt, modes_x, modes_y, modes_t,
                               max_time_steps, time_exponential_scale)
    proj_ref = jnp.einsum("ok,kxyz->oxyz", w_conv.reshape(num_channels, K), pe_ref) \
        + b_conv[:, None, None, None]
    ref = v + proj_ref[None]

    assert out.shape == (B, num_channels, nx, ny, nt)
    assert jnp.allclose(out, ref, atol=2e-3, rtol=2e-3), \
        float(jnp.max(jnp.abs(out - ref)))
    print("KERNEL_OK")
</pallas_src>

<mosaic_0001>
module attributes {stable_mosaic.version = 11 : i64} {
  func.func @_pe_proj_add_kernel(%arg0: i32, %arg1: i32, %arg2: memref<1x8x1024xf32, #tpu.memory_space<vmem>>, %arg3: memref<35x1024xf32, #tpu.memory_space<vmem>>, %arg4: memref<8x35xf32, #tpu.memory_space<vmem>>, %arg5: memref<8x1xf32, #tpu.memory_space<vmem>>, %arg6: memref<1x8x1024xf32, #tpu.memory_space<vmem>>, %arg7: memref<8x1024xf32, #tpu.memory_space<vmem>>) attributes {dimension_semantics = [#tpu.dimension_semantics<parallel>, #tpu.dimension_semantics<arbitrary>], iteration_bounds = array<i64: 2, 2>, scalar_prefetch = 0 : i64, scratch_operands = 1 : i64, tpu.core_type = #tpu.core_type<tc>, window_params = [{transform_indices = @transform_0, window_bounds = array<i64: 1, 8, 1024>}, {transform_indices = @transform_1, window_bounds = array<i64: 35, 1024>}, {pipeline_mode = #tpu.pipeline_mode<synchronous>, transform_indices = @transform_2, window_bounds = array<i64: 8, 35>}, {pipeline_mode = #tpu.pipeline_mode<synchronous>, transform_indices = @transform_3, window_bounds = array<i64: 8, 1>}, {transform_indices = @transform_4, window_bounds = array<i64: 1, 8, 1024>}]} {
    %c0_i32 = arith.constant 0 : i32
    %0 = arith.cmpi eq, %arg1, %c0_i32 : i32
    %1 = arith.extui %0 : i1 to i32
    %c0_i32_0 = arith.constant 0 : i32
    %2 = arith.cmpi ne, %1, %c0_i32_0 : i32
    scf.if %2 {
      %c0_8 = arith.constant 0 : index
      %c0_9 = arith.constant 0 : index
      %10 = vector.load %arg4[%c0_8, %c0_9] : memref<8x35xf32, #tpu.memory_space<vmem>>, vector<8x35xf32>
      %c0_10 = arith.constant 0 : index
      %c0_11 = arith.constant 0 : index
      %11 = vector.load %arg3[%c0_10, %c0_11] : memref<35x1024xf32, #tpu.memory_space<vmem>>, vector<35x1024xf32>
      %cst = arith.constant dense<0.000000e+00> : vector<8x1024xf32>
      %12 = tpu.matmul %10, %11, %cst {dimension_numbers = #tpu.dot_dimension_numbers<[1], [0], [0], [1], [0, 0, 1, 1], [], []>} : vector<8x35xf32>, vector<35x1024xf32>, vector<8x1024xf32> -> vector<8x1024xf32>
      %c0_12 = arith.constant 0 : index
      %c0_13 = arith.constant 0 : index
      %13 = vector.load %arg5[%c0_12, %c0_13] : memref<8x1xf32, #tpu.memory_space<vmem>>, vector<8x1xf32>
      %14 = vector.broadcast %13 : vector<8x1xf32> to vector<8x1024xf32>
      %15 = arith.addf %12, %14 : vector<8x1024xf32>
      %c0_14 = arith.constant 0 : index
      %c0_15 = arith.constant 0 : index
      %16 = vector.load %arg7[%c0_14, %c0_15] : memref<8x1024xf32, #tpu.memory_space<vmem>>, vector<8x1024xf32>
      tpu.vector_store %arg7[%c0_14, %c0_15], %15 {strides = array<i32>} : memref<8x1024xf32, #tpu.memory_space<vmem>>, vector<8x1024xf32>,
    } else {
    }
    %c0 = arith.constant 0 : index
    %c0_1 = arith.constant 0 : index
    %c0_2 = arith.constant 0 : index
    %3 = vector.load %arg2[%c0, %c0_1, %c0_2] : memref<1x8x1024xf32, #tpu.memory_space<vmem>>, vector<1x8x1024xf32>
    %4 = vector.shape_cast %3 : vector<1x8x1024xf32> to vector<8x1024xf32>
    %c0_3 = arith.constant 0 : index
    %c0_4 = arith.constant 0 : index
    %5 = vector.load %arg7[%c0_3, %c0_4] : memref<8x1024xf32, #tpu.memory_space<vmem>>, vector<8x1024xf32>
    %6 = arith.addf %4, %5 : vector<8x1024xf32>
    %c0_5 = arith.constant 0 : index
    %c0_6 = arith.constant 0 : index
    %c0_7 = arith.constant 0 : index
    %7 = vector.load %arg6[%c0_5, %c0_6, %c0_7] : memref<1x8x1024xf32, #tpu.memory_space<vmem>>, vector<1x8x1024xf32>
    %8 = vector.shape_cast %7 : vector<1x8x1024xf32> to vector<8x1024xf32>
    %9 = vector.shape_cast %6 : vector<8x1024xf32> to vector<1x8x1024xf32>
    tpu.vector_store %arg6[%c0_5, %c0_6, %c0_7], %9 {strides = array<i32>} : memref<1x8x1024xf32, #tpu.memory_space<vmem>>, vector<1x8x1024xf32>,
    return
  }
  func.func @transform_0(%arg0: i32, %arg1: i32) -> (i32, i32, i32) {
    %c0_i32 = arith.constant 0 : i32
    %c0_i32_0 = arith.constant 0 : i32
    return %arg1, %c0_i32, %arg0 : i32, i32, i32
  }
  func.func @transform_1(%arg0: i32, %arg1: i32) -> (i32, i32) {
    %c0_i32 = arith.constant 0 : i32
    %c0_i32_0 = arith.constant 0 : i32
    return %c0_i32, %arg0 : i32, i32
  }
  func.func @transform_2(%arg0: i32, %arg1: i32) -> (i32, i32) {
    %c0_i32 = arith.constant 0 : i32
    %c0_i32_0 = arith.constant 0 : i32
    %c0_i32_1 = arith.constant 0 : i32
    return %c0_i32, %c0_i32_0 : i32, i32
  }
  func.func @transform_3(%arg0: i32, %arg1: i32) -> (i32, i32) {
    %c0_i32 = arith.constant 0 : i32
    %c0_i32_0 = arith.constant 0 : i32
    %c0_i32_1 = arith.constant 0 : i32
    return %c0_i32, %c0_i32_0 : i32, i32
  }
  func.func @transform_4(%arg0: i32, %arg1: i32) -> (i32, i32, i32) {
    %c0_i32 = arith.constant 0 : i32
    %c0_i32_0 = arith.constant 0 : i32
    return %arg1, %c0_i32, %arg0 : i32, i32, i32
  }
}

</mosaic_0001>

<llo_original>
// kernel: tpu_custom_call.1
$region0: #{tpu_custom_call.1}
  #allocation0 [shape = 'u32[]', space=smem, size = 0x4, offset = 0x4, fixed_abs, tag = 'smem constant byte address 0x4 - core index']
  #allocation1 [shape = 'u32[144,128]{1,0:T(1,128)}', space=vmem, size = 0x12000, scoped, tag = 'internal scratch']
  #allocation2 [shape = 'f32[8,1024]{1,0:T(8,128)}', space=vmem, size = 0x8000, scoped, tag = 'scratch operand']
  %s0 = inlined_call_operand.hbm [shape: f32[2,8,2048], index: 0, kind: input, shape index: {}]
  %s1 = inlined_call_operand.hbm [shape: f32[35,2048], index: 1, kind: input, shape index: {}]
  %s2 = inlined_call_operand.vmem [shape: f32[8,35], index: 2, kind: input, shape index: {}]
  %s3 = inlined_call_operand.vmem [shape: f32[8,1], index: 3, kind: input, shape index: {}]
  %s4 = inlined_call_operand.hbm [shape: f32[2,8,2048], index: 4, kind: output, shape index: {}]
  %s5 = sld [smem:[#allocation0]]
  $region61: #{tpu_custom_call.1} parent=0
    _
  %s7 = ssub.s32 1, %s5
  %s8 = scalar_select 0, %s7, %s5
  $region1: #{tpu_custom_call.1} parent=0
    #allocation3 [shape = 'u8[65536]{0}', space=vmem, size = 0x10000, scoped, tag = 'input window, operand 0']
    #allocation4 [shape = 's32[2]{0}', space=sflag, size = 0x8, scoped, tag = 'scoped memory for tpu_custom_call.1']
    #allocation5 [shape = 's32[2]{0}', space=sflag, size = 0x8, scoped, tag = 'scoped memory for tpu_custom_call.1']
    #allocation6 [shape = 'u8[327680]{0}', space=vmem, size = 0x50000, scoped, tag = 'input window, operand 1']
    #allocation7 [shape = 's32[2]{0}', space=sflag, size = 0x8, scoped, tag = 'scoped memory for tpu_custom_call.1']
    #allocation8 [shape = 'u8[65536]{0}', space=vmem, size = 0x10000, scoped, tag = 'output window, operand 0']
    %9 = vsyncpa [#allocation4], 0
    %s10 = scalar_lea.sflag [#allocation4], 1
    %11 = vsyncpa %s10, 0
    %12 = vsyncpa [#allocation7], 0
    %s13 = scalar_lea.sflag [#allocation7], 1
    %14 = vsyncpa %s13, 0
    %15 = vsyncpa [#allocation5], 0
    %s16 = scalar_lea.sflag [#allocation5], 1
    %17 = vsyncpa %s16, 0
    loop: start=0, step=1, limit=6
    $region2: #{tpu_custom_call.1} parent=1 // loop_pre_header
      _
    $region3: #{tpu_custom_call.1} parent=1 // loop_header
      %s19 = sphi 0, %s23
      %p20 = scmp.ge.s32.totalorder %s19, 6
      %s26 = sphi 0, %s38
      %s27 = sphi 0, %s34
      %s28 = sphi 0, %s26
      %s29 = sphi 0, %s27
      %s30 = sphi 0, %s28
      %s31 = sphi 0, %s29
      %s43 = sphi 0, %s45
      %s46 = sphi 0, %s43
      %s47 = sphi 0, %s46
      %s63 = sphi 0, %s47
      %s69 = sphi 0, %s71
      %s72 = sphi 0, %s69
      %s73 = sphi 0, %s72
      %s89 = sphi 0, %s73
      %s93 = sphi 0, %s93
      %s95 = sphi 0, %s93
      %s96 = sphi 0, %s95
      %s110 = sphi 0, %s96
      %s114 = sphi 0, %s114
      %s116 = sphi 0, %s114
      %s117 = sphi 0, %s116
      %s131 = sphi 0, %s117
      %s139 = sphi 0, %s141
      %s142 = sphi 0, %s139
      %s143 = sphi 0, %s142
      %s159 = sphi 0, %s143
    $region4: #{tpu_custom_call.1} parent=1 // loop_header_branch
      %22 = sbr.rel (%p20) target = $region8
    $region5: #{tpu_custom_call.1} parent=1 // loop_body
      %s24 = ssub.s32 %s19, 1
      %s25 = ssub.s32 %s19, 2
      %s32 = sadd.s32 1, %s27
      %p33 = scmp.ge.s32.totalorder %s32, 2
      %s34 = scalar_select %p33, 0, %s32
      %s35 = sadd.s32 1, %s26
      %s36 = scalar_select %p33, %s35, %s26
      %p37 = scmp.ge.s32.totalorder %s36, 2
      %s38 = scalar_select %p37, 0, %s36
      %s39 = ssub.s32 %s27, %s34
      %s40 = ssub.s32 %s26, %s38
      %s41 = sor.u32 %s39, %s40
      %p42 = scmp.eq.s32.totalorder %s41, 0
      %s44 = sadd.s32 %s43, 1
      %s45 = scalar_select %p42, %s43, %s44
      %p48 = pneg %p42
      %p49 = scmp.eq.s32.totalorder %s19, 3
      %p50 = por %p48, %p49
      %p51 = scmp.ne.s32.totalorder %s43, %s46
      %p52 = scmp.eq.s32.totalorder %s19, 0
      %p53 = por %p51, %p52
      %p54 = scmp.ne.s32.totalorder %s43, %s46
      %p55 = scmp.eq.s32.totalorder %s24, 3
      %p56 = por %p54, %p55
      %p57 = scmp.ne.s32.totalorder %s46, %s47
      %p58 = scmp.eq.s32.totalorder %s24, 0
      %p59 = por %p57, %p58
      %p60 = scmp.ne.s32.totalorder %s46, %s47
      %p61 = scmp.eq.s32.totalorder %s25, 3
      %p62 = por %p60, %p61
      %p64 = scmp.ne.s32.totalorder %s47, %s63
      %p65 = scmp.eq.s32.totalorder %s25, 0
      %p66 = por %p64, %p65
      %s67 = ssub.s32 %s26, %s38
      %p68 = scmp.eq.s32.totalorder %s67, 0
      %s70 = sadd.s32 %s69, 1
      %s71 = scalar_select %p68, %s69, %s70
      %p74 = pneg %p68
      %p75 = scmp.eq.s32.totalorder %s19, 3
      %p76 = por %p74, %p75
      %p77 = scmp.ne.s32.totalorder %s69, %s72
      %p78 = scmp.eq.s32.totalorder %s19, 0
      %p79 = por %p77, %p78
      %p80 = scmp.ne.s32.totalorder %s69, %s72
      %p81 = scmp.eq.s32.totalorder %s24, 3
      %p82 = por %p80, %p81
      %p83 = scmp.ne.s32.totalorder %s72, %s73
      %p84 = scmp.eq.s32.totalorder %s24, 0
      %p85 = por %p83, %p84
      %p86 = scmp.ne.s32.totalorder %s72, %s73
      %p87 = scmp.eq.s32.totalorder %s25, 3
      %p88 = por %p86, %p87
      %p90 = scmp.ne.s32.totalorder %s73, %s89
      %p91 = scmp.eq.s32.totalorder %s25, 0
      %p92 = por %p90, %p91
      %s94 = sadd.s32 %s93, 1
      %p97 = scmp.eq.s32.totalorder %s19, 3
      %p98 = scmp.ne.s32.totalorder %s93, %s95
      %p99 = scmp.eq.s32.totalorder %s19, 0
      %p100 = por %p98, %p99
      %p101 = scmp.ne.s32.totalorder %s93, %s95
      %p102 = scmp.eq.s32.totalorder %s24, 3
      %p103 = por %p101, %p102
      %p104 = scmp.ne.s32.totalorder %s95, %s96
      %p105 = scmp.eq.s32.totalorder %s24, 0
      %p106 = por %p104, %p105
      %p107 = scmp.ne.s32.totalorder %s95, %s96
      %p108 = scmp.eq.s32.totalorder %s25, 3
      %p109 = por %p107, %p108
      %p111 = scmp.ne.s32.totalorder %s96, %s110
      %p112 = scmp.eq.s32.totalorder %s25, 0
      %p113 = por %p111, %p112
      %s115 = sadd.s32 %s114, 1
      %p118 = scmp.eq.s32.totalorder %s19, 3
      %p119 = scmp.ne.s32.totalorder %s114, %s116
      %p120 = scmp.eq.s32.totalorder %s19, 0
      %p121 = por %p119, %p120
      %p122 = scmp.ne.s32.totalorder %s114, %s116
      %p123 = scmp.eq.s32.totalorder %s24, 3
      %p124 = por %p122, %p123
      %p125 = scmp.ne.s32.totalorder %s116, %s117
      %p126 = scmp.eq.s32.totalorder %s24, 0
      %p127 = por %p125, %p126
      %p128 = scmp.ne.s32.totalorder %s116, %s117
      %p129 = scmp.eq.s32.totalorder %s25, 3
      %p130 = por %p128, %p129
      %p132 = scmp.ne.s32.totalorder %s117, %s131
      %p133 = scmp.eq.s32.totalorder %s25, 0
      %p134 = por %p132, %p133
      %s135 = ssub.s32 %s27, %s34
      %s136 = ssub.s32 %s26, %s38
      %s137 = sor.u32 %s135, %s136
      %p138 = scmp.eq.s32.totalorder %s137, 0
      %s140 = sadd.s32 %s139, 1
      %s141 = scalar_select %p138, %s139, %s140
      %p144 = pneg %p138
      %p145 = scmp.eq.s32.totalorder %s19, 3
      %p146 = por %p144, %p145
      %p147 = scmp.ne.s32.totalorder %s139, %s142
      %p148 = scmp.eq.s32.totalorder %s19, 0
      %p149 = por %p147, %p148
      %p150 = scmp.ne.s32.totalorder %s139, %s142
      %p151 = scmp.eq.s32.totalorder %s24, 3
      %p152 = por %p150, %p151
      %p153 = scmp.ne.s32.totalorder %s142, %s143
      %p154 = scmp.eq.s32.totalorder %s24, 0
      %p155 = por %p153, %p154
      %p156 = scmp.ne.s32.totalorder %s142, %s143
      %p157 = scmp.eq.s32.totalorder %s25, 3
      %p158 = por %p156, %p157
      %p160 = scmp.ne.s32.totalorder %s143, %s159
      %p161 = scmp.eq.s32.totalorder %s25, 0
      %p162 = por %p160, %p161
      %p163 = scmp.le.s32.totalorder 1, %s19
      %p164 = scmp.lt.s32.totalorder %s19, 5
      %p165 = pnand %p163, %p164
      %p166 = pneg %p165
      // Predicated region
      $region9: #{tpu_custom_call.1} parent=5 // pred_check
        _
      $region10: #{tpu_custom_call.1} parent=5 // pred_check_branch
        %168 = sbr.rel (%p165) target = $region12
      $region11: #{tpu_custom_call.1} parent=5 // pred_region
        %s169 = ssub.s32 %s19, 1
        // Predicated region
        $region13: #{tpu_custom_call.1} parent=11 // pred_check
          %p170 = pneg %p106
        $region14: #{tpu_custom_call.1} parent=11 // pred_check_branch
          %172 = sbr.rel (%p170) target = $region16
        $region15: #{tpu_custom_call.1} parent=11 // pred_region
          _
        $region16: #{tpu_custom_call.1} parent=11 // pred_fallthru
          _
        // Predicated region
        $region17: #{tpu_custom_call.1} parent=11 // pred_check
          %p173 = pneg %p127
        $region18: #{tpu_custom_call.1} parent=11 // pred_check_branch
          %175 = sbr.rel (%p173) target = $region20
        $region19: #{tpu_custom_call.1} parent=11 // pred_region
          _
        $region20: #{tpu_custom_call.1} parent=11 // pred_fallthru
          _
      $region12: #{tpu_custom_call.1} parent=5 // pred_fallthru
        _
      %p176 = scmp.lt.s32.totalorder %s19, 4
      // Predicated region
      $region21: #{tpu_custom_call.1} parent=5 // pred_check
        %p177 = pneg %p176
      $region22: #{tpu_custom_call.1} parent=5 // pred_check_branch
        %179 = sbr.rel (%p177) target = $region24
      $region23: #{tpu_custom_call.1} parent=5 // pred_region
        // Predicated region
        $region25: #{tpu_custom_call.1} parent=23 // pred_check
          %p180 = pneg %p53
        $region26: #{tpu_custom_call.1} parent=23 // pred_check_branch
          %182 = sbr.rel (%p180) target = $region28
        $region27: #{tpu_custom_call.1} parent=23 // pred_region
          %s183 = sand.u32 %s43, 1
          %s184 = scalar_lea.sflag [#allocation4], %s183
          %s185 = sand.u32 %s43, 1
          %s186 = smul.addr %s185, 64
          %s187 = scalar_lea.vmem [#allocation3], %s186
          %s188 = smul.u32 8, %s26
          %s190 = ssub.s32 1024, 1024
          %191 = vsyncadd %s184, %s190
          %s192 = smul.addr %s27, 16
          %s193 = sadd.s32 %s188, %s192
          %s194 = smul.addr %s193, 128
          %s195 = scalar_lea.hbm %s0, %s194
          %s197 = sshll.u32 %s187, 4
          %s198 = int_to_ptr.vmem [resolvable:$true] %s197
          %200 = dma.hbm_to_vmem [thread:$0]  %s195, 1024, %s198, %s184
        $region28: #{tpu_custom_call.1} parent=23 // pred_fallthru
          _
        // Predicated region
        $region29: #{tpu_custom_call.1} parent=23 // pred_check
          %p201 = pneg %p79
        $region30: #{tpu_custom_call.1} parent=23 // pred_check_branch
          %203 = sbr.rel (%p201) target = $region32
        $region31: #{tpu_custom_call.1} parent=23 // pred_region
          %s204 = sand.u32 %s69, 1
          %s205 = scalar_lea.sflag [#allocation7], %s204
          %s206 = sand.u32 %s69, 1
          %s207 = smul.addr %s206, 320
          %s208 = scalar_lea.vmem [#allocation6], %s207
          %s209 = smul.u32 8, %s26
          %s211 = ssub.s32 5120, 5120
          %212 = vsyncadd %s205, %s211
          %s213 = smul.addr %s209, 128
          %s214 = scalar_lea.hbm %s1, %s213
          %s215 = sshll.u32 %s208, 4
          %s216 = int_to_ptr.vmem [resolvable:$true] %s215
          %221 = dma.hbm_to_vmem [thread:$0]  %s214, 5120, %s216, %s205, 2048, 1024, 64
        $region32: #{tpu_custom_call.1} parent=23 // pred_fallthru
          _
      $region24: #{tpu_custom_call.1} parent=5 // pred_fallthru
        _
      %p222 = scmp.le.s32.totalorder 1, %s19
      %p223 = scmp.lt.s32.totalorder %s19, 5
      %p224 = pnand %p222, %p223
      %p225 = pneg %p224
      // Predicated region
      $region33: #{tpu_custom_call.1} parent=5 // pred_check
        _
      $region34: #{tpu_custom_call.1} parent=5 // pred_check_branch
        %227 = sbr.rel (%p224) target = $region36
      $region35: #{tpu_custom_call.1} parent=5 // pred_region
        %s228 = ssub.s32 %s19, 1
        %s229 = sand.u32 %s46, 1
        %s230 = scalar_lea.sflag [#allocation4], %s229
        %s231 = sand.u32 %s46, 1
        %s232 = smul.addr %s231, 64
        %s233 = scalar_lea.vmem [#allocation3], %s232
        // Predicated region
        $region37: #{tpu_custom_call.1} parent=35 // pred_check
          %p234 = pneg %p59
        $region38: #{tpu_custom_call.1} parent=35 // pred_check_branch
          %236 = sbr.rel (%p234) target = $region40
        $region39: #{tpu_custom_call.1} parent=35 // pred_region
          %237 = dma.done %s230, 1024
        $region40: #{tpu_custom_call.1} parent=35 // pred_fallthru
          _
        %s238 = sand.u32 %s72, 1
        %s239 = scalar_lea.sflag [#allocation7], %s238
        %s240 = sand.u32 %s72, 1
        %s241 = smul.addr %s240, 320
        %s242 = scalar_lea.vmem [#allocation6], %s241
        // Predicated region
        $region41: #{tpu_custom_call.1} parent=35 // pred_check
          %p243 = pneg %p85
        $region42: #{tpu_custom_call.1} parent=35 // pred_check_branch
          %245 = sbr.rel (%p243) target = $region44
        $region43: #{tpu_custom_call.1} parent=35 // pred_region
          %246 = dma.done %s239, 5120
        $region44: #{tpu_custom_call.1} parent=35 // pred_fallthru
          _
        %s247 = sand.u32 %s46, 1
        %s248 = scalar_lea.sflag [#allocation4], %s247
        %s249 = sand.u32 %s46, 1
        %s250 = smul.addr %s249, 64
        %s251 = scalar_lea.vmem [#allocation3], %s250
        %p252 = pneg %p59
        %p253 = pneg %p56
        %s254 = sand.u32 %s72, 1
        %s255 = scalar_lea.sflag [#allocation7], %s254
        %s256 = sand.u32 %s72, 1
        %s257 = smul.addr %s256, 320
        %s258 = scalar_lea.vmem [#allocation6], %s257
        %p259 = pneg %p85
        %p260 = pneg %p82
        %p261 = pneg %p106
        %p262 = pneg %p103
        %p263 = pneg %p127
        %p264 = pneg %p124
        %p265 = pneg %p155
        %p266 = pneg %p152
        %s267 = sand.u32 %s142, 1
        %s268 = scalar_lea.sflag [#allocation5], %s267
        %s269 = sand.u32 %s142, 1
        %s270 = smul.addr %s269, 64
        %s271 = scalar_lea.vmem [#allocation8], %s270
        %s272 = smul.u32 8, %s28
        %s273 = smul.u32 8, %s28
        %s274 = smul.u32 8, %s28
        %p275 = scmp.eq.s32.totalorder %s29, 0
        // Predicated region
        $region45: #{tpu_custom_call.1} parent=35 // pred_check
          %p276 = pneg %p275
        $region46: #{tpu_custom_call.1} parent=35 // pred_check_branch
          %278 = sbr.rel (%p276) target = $region48
        $region47: #{tpu_custom_call.1} parent=35 // pred_region
          %v279 = vld [vmem:[%s2] sm:$0xff]
          %v280 = vld [vmem:[%s242] sm:$0xff]
          %v281 = vld [vmem:[%s242 + $0x8] sm:$0xff]
          %v282 = vld [vmem:[%s242 + $0x10] sm:$0xff]
          %v283 = vld [vmem:[%s242 + $0x18] sm:$0xff]
          %v284 = vld [vmem:[%s242 + $0x20] sm:$0xff]
          %v285 = vld [vmem:[%s242 + $0x28] sm:$0xff]
          %v286 = vld [vmem:[%s242 + $0x30] sm:$0xff]
          %v287 = vld [vmem:[%s242 + $0x38] sm:$0xff]
          %v288 = vld [vmem:[%s242 + $0x40] sm:$0xff]
          %v289 = vld [vmem:[%s242 + $0x48] sm:$0xff]
          %v290 = vld [vmem:[%s242 + $0x50] sm:$0xff]
          %v291 = vld [vmem:[%s242 + $0x58] sm:$0xff]
          %v292 = vld [vmem:[%s242 + $0x60] sm:$0xff]
          %v293 = vld [vmem:[%s242 + $0x68] sm:$0xff]
          %v294 = vld [vmem:[%s242 + $0x70] sm:$0xff]
          %v295 = vld [vmem:[%s242 + $0x78] sm:$0xff]
          %v296 = vld [vmem:[%s242 + $0x80] sm:$0xff]
          %v297 = vld [vmem:[%s242 + $0x88] sm:$0xff]
          %v298 = vld [vmem:[%s242 + $0x90] sm:$0xff]
          %v299 = vld [vmem:[%s242 + $0x98] sm:$0xff]
          %v300 = vld [vmem:[%s242 + $0xa0] sm:$0xff]
          %v301 = vld [vmem:[%s242 + $0xa8] sm:$0xff]
          %v302 = vld [vmem:[%s242 + $0xb0] sm:$0xff]
          %v303 = vld [vmem:[%s242 + $0xb8] sm:$0xff]
          %v304 = vld [vmem:[%s242 + $0xc0] sm:$0xff]
          %v305 = vld [vmem:[%s242 + $0xc8] sm:$0xff]
          %v306 = vld [vmem:[%s242 + $0xd0] sm:$0xff]
          %v307 = vld [vmem:[%s242 + $0xd8] sm:$0xff]
          %v308 = vld [vmem:[%s242 + $0xe0] sm:$0xff]
          %v309 = vld [vmem:[%s242 + $0xe8] sm:$0xff]
          %v310 = vld [vmem:[%s242 + $0xf0] sm:$0xff]
          %v311 = vld [vmem:[%s242 + $0xf8] sm:$0xff]
          %v312 = vld [vmem:[%s242 + $0x100] sm:$0x7]
          %v313 = vld [vmem:[%s242 + $0x108] sm:$0x7]
          %v314 = vld [vmem:[%s242 + $0x110] sm:$0x7]
          %v315 = vld [vmem:[%s242 + $0x118] sm:$0x7]
          %v316 = vld [vmem:[%s242 + $0x120] sm:$0x7]
          %v317 = vld [vmem:[%s242 + $0x128] sm:$0x7]
          %v318 = vld [vmem:[%s242 + $0x130] sm:$0x7]
          %v319 = vld [vmem:[%s242 + $0x138] sm:$0x7]
          %v320 = vld [vmem:[%s3] sm:$0xff]
          %322 = vset.pattern.permute.xlu0 0
          %323 = vperm.xlu0 %322, %v320
          %v324 = vpop.permute.xlu0 %323
          %vm326 = vcmask 285696
          %v328 = vsel %vm326, %v279, 0
          %vm330 = vcmask 1042432
          %v332 = vsel %vm330, %v312, 0
          %v335 = vsel %vm330, %v313, 0
          %v338 = vsel %vm330, %v314, 0
          %v341 = vsel %vm330, %v315, 0
          %v344 = vsel %vm330, %v316, 0
          %v347 = vsel %vm330, %v317, 0
          %v350 = vsel %vm330, %v318, 0
          %v353 = vsel %vm330, %v319, 0
          %355 = vmatprep.subr.mxu0 0.0
          %356 = vmatpush1.msra.mxu0 0.0
          %357 = vmatprep.subr.mxu0 0.0
          %358 = vmatpush1.msra.mxu0 0.0
          %359 = vmatprep.subr.mxu0 0.0
          %360 = vmatpush1.msra.mxu0 0.0
          %361 = vmatprep.subr.mxu0 0.0
          %362 = vmatpush1.msra.mxu0 0.0
          %363 = vmatprep.subr.mxu0 0.0
          %364 = vmatpush1.msra.mxu0 0.0
          %365 = vmatprep.subr.mxu0 0.0
          %366 = vmatpush1.msra.mxu0 0.0
          %367 = vmatprep.subr.mxu0 0.0
          %368 = vmatpush1.msra.mxu0 0.0
          %369 = vmatprep.subr.mxu0 0.0
          %370 = vmatpush1.msra.mxu0 0.0
          %371 = vmatprep.subr.mxu0 0.0
          %372 = vmatpush1.msra.mxu0 0.0
          %373 = vmatprep.subr.mxu0 0.0
          %374 = vmatpush1.msra.mxu0 0.0
          %375 = vmatprep.subr.mxu0 0.0
          %376 = vmatpush1.msra.mxu0 0.0
          %377 = vmatprep.subr.mxu0 %v335
          %378 = vmatpush1.msra.mxu0 %v332
          %379 = vmatprep.subr.mxu0 %v305
          %380 = vmatpush1.msra.mxu0 %v304
          %381 = vmatprep.subr.mxu0 %v297
          %382 = vmatpush1.msra.mxu0 %v296
          %383 = vmatprep.subr.mxu0 %v289
          %384 = vmatpush1.msra.mxu0 %v288
          %385 = vmatprep.subr.mxu0 %v281
          %386 = vmatpush1.msra.mxu0 %v280
          %387 = vmatprep.subr.mxu0 0.0
          %388 = vmatpush2.msra.mxu0 0.0
          %389 = vmatprep.subr.mxu0 0.0
          %390 = vmatpush2.msra.mxu0 0.0
          %391 = vmatprep.subr.mxu0 0.0
          %392 = vmatpush2.msra.mxu0 0.0
          %393 = vmatprep.subr.mxu0 0.0
          %394 = vmatpush2.msra.mxu0 0.0
          %395 = vmatprep.subr.mxu0 0.0
          %396 = vmatpush2.msra.mxu0 0.0
          %397 = vmatprep.subr.mxu0 0.0
          %398 = vmatpush2.msra.mxu0 0.0
          %399 = vmatprep.subr.mxu0 0.0
          %400 = vmatpush2.msra.mxu0 0.0
          %401 = vmatprep.subr.mxu0 0.0
          %402 = vmatpush2.msra.mxu0 0.0
          %403 = vmatprep.subr.mxu0 0.0
          %404 = vmatpush2.msra.mxu0 0.0
          %405 = vmatprep.subr.mxu0 0.0
          %406 = vmatpush2.msra.mxu0 0.0
          %407 = vmatprep.subr.mxu0 0.0
          %408 = vmatpush2.msra.mxu0 0.0
          %409 = vmatprep.subr.mxu0 0.0
          %410 = vmatpush2.msra.mxu0 0.0
          %411 = vmatprep.subr.mxu0 0.0
          %412 = vmatpush2.msra.mxu0 0.0
          %413 = vmatprep.subr.mxu0 0.0
          %414 = vmatpush2.msra.mxu0 0.0
          %415 = vmatprep.subr.mxu0 0.0
          %416 = vmatpush2.msra.mxu0 0.0
          %417 = vmatprep.subr.mxu0 0.0
          %418 = vmatpush2.msra.mxu0 0.0
          %419 = vmatprep.mubr.f32.mxu0 0.0
          %420 = vmatmul.mubr.f32.gmra.mxu0 %v328
          %v421 = vpop.f32.mrf.mxu0
          %v422 = vadd.f32 %v324, %v421
          %v423 = vpop.f32.mrf.mxu0
          %v424 = vadd.f32 %v324, %v423
          %425 = vdwg.mxu0
          %426 = vmatprep.subr.mxu0 0.0
          %427 = vmatpush1.msra.mxu0 0.0
          %428 = vmatprep.subr.mxu0 0.0
          %429 = vmatpush1.msra.mxu0 0.0
          %430 = vmatprep.subr.mxu0 0.0
          %431 = vmatpush1.msra.mxu0 0.0
          %432 = vmatprep.subr.mxu0 0.0
          %433 = vmatpush1.msra.mxu0 0.0
          %434 = vmatprep.subr.mxu0 0.0
          %435 = vmatpush1.msra.mxu0 0.0
          %436 = vmatprep.subr.mxu0 0.0
          %437 = vmatpush1.msra.mxu0 0.0
          %438 = vmatprep.subr.mxu0 0.0
          %439 = vmatpush1.msra.mxu0 0.0
          %440 = vmatprep.subr.mxu0 0.0
          %441 = vmatpush1.msra.mxu0 0.0
          %442 = vmatprep.subr.mxu0 0.0
          %443 = vmatpush1.msra.mxu0 0.0
          %444 = vmatprep.subr.mxu0 0.0
          %445 = vmatpush1.msra.mxu0 0.0
          %446 = vmatprep.subr.mxu0 0.0
          %447 = vmatpush1.msra.mxu0 0.0
          %448 = vmatprep.subr.mxu0 %v341
          %449 = vmatpush1.msra.mxu0 %v338
          %450 = vmatprep.subr.mxu0 %v307
          %451 = vmatpush1.msra.mxu0 %v306
          %452 = vmatprep.subr.mxu0 %v299
          %453 = vmatpush1.msra.mxu0 %v298
          %454 = vmatprep.subr.mxu0 %v291
          %455 = vmatpush1.msra.mxu0 %v290
          %456 = vmatprep.subr.mxu0 %v283
          %457 = vmatpush1.msra.mxu0 %v282
          %458 = vmatprep.subr.mxu0 0.0
          %459 = vmatpush2.msra.mxu0 0.0
          %460 = vmatprep.subr.mxu0 0.0
          %461 = vmatpush2.msra.mxu0 0.0
          %462 = vmatprep.subr.mxu0 0.0
          %463 = vmatpush2.msra.mxu0 0.0
          %464 = vmatprep.subr.mxu0 0.0
          %465 = vmatpush2.msra.mxu0 0.0
          %466 = vmatprep.subr.mxu0 0.0
          %467 = vmatpush2.msra.mxu0 0.0
          %468 = vmatprep.subr.mxu0 0.0
          %469 = vmatpush2.msra.mxu0 0.0
          %470 = vmatprep.subr.mxu0 0.0
          %471 = vmatpush2.msra.mxu0 0.0
          %472 = vmatprep.subr.mxu0 0.0
          %473 = vmatpush2.msra.mxu0 0.0
          %474 = vmatprep.subr.mxu0 0.0
          %475 = vmatpush2.msra.mxu0 0.0
          %476 = vmatprep.subr.mxu0 0.0
          %477 = vmatpush2.msra.mxu0 0.0
          %478 = vmatprep.subr.mxu0 0.0
          %479 = vmatpush2.msra.mxu0 0.0
          %480 = vmatprep.subr.mxu0 0.0
          %481 = vmatpush2.msra.mxu0 0.0
          %482 = vmatprep.subr.mxu0 0.0
          %483 = vmatpush2.msra.mxu0 0.0
          %484 = vmatprep.subr.mxu0 0.0
          %485 = vmatpush2.msra.mxu0 0.0
          %486 = vmatprep.subr.mxu0 0.0
          %487 = vmatpush2.msra.mxu0 0.0
          %488 = vmatprep.subr.mxu0 0.0
          %489 = vmatpush2.msra.mxu0 0.0
          %490 = vmatprep.mubr.f32.mxu0 0.0
          %491 = vmatmul.mubr.f32.gmra.mxu0 %v328
          %v492 = vpop.f32.mrf.mxu0
          %v493 = vadd.f32 %v324, %v492
          %v494 = vpop.f32.mrf.mxu0
          %v495 = vadd.f32 %v324, %v494
          %496 = vdwg.mxu0
          %497 = vmatprep.subr.mxu0 0.0
          %498 = vmatpush1.msra.mxu0 0.0
          %499 = vmatprep.subr.mxu0 0.0
          %500 = vmatpush1.msra.mxu0 0.0
          %501 = vmatprep.subr.mxu0 0.0
          %502 = vmatpush1.msra.mxu0 0.0
          %503 = vmatprep.subr.mxu0 0.0
          %504 = vmatpush1.msra.mxu0 0.0
          %505 = vmatprep.subr.mxu0 0.0
          %506 = vmatpush1.msra.mxu0 0.0
          %507 = vmatprep.subr.mxu0 0.0
          %508 = vmatpush1.msra.mxu0 0.0
          %509 = vmatprep.subr.mxu0 0.0
          %510 = vmatpush1.msra.mxu0 0.0
          %511 = vmatprep.subr.mxu0 0.0
          %512 = vmatpush1.msra.mxu0 0.0
          %513 = vmatprep.subr.mxu0 0.0
          %514 = vmatpush1.msra.mxu0 0.0
          %515 = vmatprep.subr.mxu0 0.0
          %516 = vmatpush1.msra.mxu0 0.0
          %517 = vmatprep.subr.mxu0 0.0
          %518 = vmatpush1.msra.mxu0 0.0
          %519 = vmatprep.subr.mxu0 %v347
          %520 = vmatpush1.msra.mxu0 %v344
          %521 = vmatprep.subr.mxu0 %v309
          %522 = vmatpush1.msra.mxu0 %v308
          %523 = vmatprep.subr.mxu0 %v301
          %524 = vmatpush1.msra.mxu0 %v300
          %525 = vmatprep.subr.mxu0 %v293
          %526 = vmatpush1.msra.mxu0 %v292
          %527 = vmatprep.subr.mxu0 %v285
          %528 = vmatpush1.msra.mxu0 %v284
          %529 = vmatprep.subr.mxu0 0.0
          %530 = vmatpush2.msra.mxu0 0.0
          %531 = vmatprep.subr.mxu0 0.0
          %532 = vmatpush2.msra.mxu0 0.0
          %533 = vmatprep.subr.mxu0 0.0
          %534 = vmatpush2.msra.mxu0 0.0
          %535 = vmatprep.subr.mxu0 0.0
          %536 = vmatpush2.msra.mxu0 0.0
          %537 = vmatprep.subr.mxu0 0.0
          %538 = vmatpush2.msra.mxu0 0.0
          %539 = vmatprep.subr.mxu0 0.0
          %540 = vmatpush2.msra.mxu0 0.0
          %541 = vmatprep.subr.mxu0 0.0
          %542 = vmatpush2.msra.mxu0 0.0
          %543 = vmatprep.subr.mxu0 0.0
          %544 = vmatpush2.msra.mxu0 0.0
          %545 = vmatprep.subr.mxu0 0.0
          %546 = vmatpush2.msra.mxu0 0.0
          %547 = vmatprep.subr.mxu0 0.0
          %548 = vmatpush2.msra.mxu0 0.0
          %549 = vmatprep.subr.mxu0 0.0
          %550 = vmatpush2.msra.mxu0 0.0
          %551 = vmatprep.subr.mxu0 0.0
          %552 = vmatpush2.msra.mxu0 0.0
          %553 = vmatprep.subr.mxu0 0.0
          %554 = vmatpush2.msra.mxu0 0.0
          %555 = vmatprep.subr.mxu0 0.0
          %556 = vmatpush2.msra.mxu0 0.0
          %557 = vmatprep.subr.mxu0 0.0
          %558 = vmatpush2.msra.mxu0 0.0
          %559 = vmatprep.subr.mxu0 0.0
          %560 = vmatpush2.msra.mxu0 0.0
          %561 = vmatprep.mubr.f32.mxu0 0.0
          %562 = vmatmul.mubr.f32.gmra.mxu0 %v328
          %v563 = vpop.f32.mrf.mxu0
          %v564 = vadd.f32 %v324, %v563
          %v565 = vpop.f32.mrf.mxu0
          %v566 = vadd.f32 %v324, %v565
          %567 = vdwg.mxu0
          %568 = vmatprep.subr.mxu0 0.0
          %569 = vmatpush1.msra.mxu0 0.0
          %570 = vmatprep.subr.mxu0 0.0
          %571 = vmatpush1.msra.mxu0 0.0
          %572 = vmatprep.subr.mxu0 0.0
          %573 = vmatpush1.msra.mxu0 0.0
          %574 = vmatprep.subr.mxu0 0.0
          %575 = vmatpush1.msra.mxu0 0.0
          %576 = vmatprep.subr.mxu0 0.0
          %577 = vmatpush1.msra.mxu0 0.0
          %578 = vmatprep.subr.mxu0 0.0
          %579 = vmatpush1.msra.mxu0 0.0
          %580 = vmatprep.subr.mxu0 0.0
          %581 = vmatpush1.msra.mxu0 0.0
          %582 = vmatprep.subr.mxu0 0.0
          %583 = vmatpush1.msra.mxu0 0.0
          %584 = vmatprep.subr.mxu0 0.0
          %585 = vmatpush1.msra.mxu0 0.0
          %586 = vmatprep.subr.mxu0 0.0
          %587 = vmatpush1.msra.mxu0 0.0
          %588 = vmatprep.subr.mxu0 0.0
          %589 = vmatpush1.msra.mxu0 0.0
          %590 = vmatprep.subr.mxu0 %v353
          %591 = vmatpush1.msra.mxu0 %v350
          %592 = vmatprep.subr.mxu0 %v311
          %593 = vmatpush1.msra.mxu0 %v310
          %594 = vmatprep.subr.mxu0 %v303
          %595 = vmatpush1.msra.mxu0 %v302
          %596 = vmatprep.subr.mxu0 %v295
          %597 = vmatpush1.msra.mxu0 %v294
          %598 = vmatprep.subr.mxu0 %v287
          %599 = vmatpush1.msra.mxu0 %v286
          %600 = vmatprep.subr.mxu0 0.0
          %601 = vmatpush2.msra.mxu0 0.0
          %602 = vmatprep.subr.mxu0 0.0
          %603 = vmatpush2.msra.mxu0 0.0
          %604 = vmatprep.subr.mxu0 0.0
          %605 = vmatpush2.msra.mxu0 0.0
          %606 = vmatprep.subr.mxu0 0.0
          %607 = vmatpush2.msra.mxu0 0.0
          %608 = vmatprep.subr.mxu0 0.0
          %609 = vmatpush2.msra.mxu0 0.0
          %610 = vmatprep.subr.mxu0 0.0
          %611 = vmatpush2.msra.mxu0 0.0
          %612 = vmatprep.subr.mxu0 0.0
          %613 = vmatpush2.msra.mxu0 0.0
          %614 = vmatprep.subr.mxu0 0.0
          %615 = vmatpush2.msra.mxu0 0.0
          %616 = vmatprep.subr.mxu0 0.0
          %617 = vmatpush2.msra.mxu0 0.0
          %618 = vmatprep.subr.mxu0 0.0
          %619 = vmatpush2.msra.mxu0 0.0
          %620 = vmatprep.subr.mxu0 0.0
          %621 = vmatpush2.msra.mxu0 0.0
          %622 = vmatprep.subr.mxu0 0.0
          %623 = vmatpush2.msra.mxu0 0.0
          %624 = vmatprep.subr.mxu0 0.0
          %625 = vmatpush2.msra.mxu0 0.0
          %626 = vmatprep.subr.mxu0 0.0
          %627 = vmatpush2.msra.mxu0 0.0
          %628 = vmatprep.subr.mxu0 0.0
          %629 = vmatpush2.msra.mxu0 0.0
          %630 = vmatprep.subr.mxu0 0.0
          %631 = vmatpush2.msra.mxu0 0.0
          %632 = vmatprep.mubr.f32.mxu0 0.0
          %633 = vmatmul.mubr.f32.gmra.mxu0 %v328
          %v634 = vpop.f32.mrf.mxu0
          %v635 = vadd.f32 %v324, %v634
          %v636 = vpop.f32.mrf.mxu0
          %v637 = vadd.f32 %v324, %v636
          %638 = vdwg.mxu0
          %639 = vst [vmem:[#allocation2] sm:$0xff] %v422
          %640 = vst [vmem:[#allocation2 + $0x8] sm:$0xff] %v424
          %641 = vst [vmem:[#allocation2 + $0x10] sm:$0xff] %v493
          %642 = vst [vmem:[#allocation2 + $0x18] sm:$0xff] %v495
          %643 = vst [vmem:[#allocation2 + $0x20] sm:$0xff] %v564
          %644 = vst [vmem:[#allocation2 + $0x28] sm:$0xff] %v566
          %645 = vst [vmem:[#allocation2 + $0x30] sm:$0xff] %v635
          %646 = vst [vmem:[#allocation2 + $0x38] sm:$0xff] %v637
        $region48: #{tpu_custom_call.1} parent=35 // pred_fallthru
          _
        %v647 = vld [vmem:[%s233] sm:$0xff]
        %v648 = vld [vmem:[%s233 + $0x8] sm:$0xff]
        %v649 = vld [vmem:[%s233 + $0x10] sm:$0xff]
        %v650 = vld [vmem:[%s233 + $0x18] sm:$0xff]
        %v651 = vld [vmem:[%s233 + $0x20] sm:$0xff]
        %v652 = vld [vmem:[%s233 + $0x28] sm:$0xff]
        %v653 = vld [vmem:[%s233 + $0x30] sm:$0xff]
        %v654 = vld [vmem:[%s233 + $0x38] sm:$0xff]
        %v655 = vld [vmem:[#allocation2] sm:$0xff]
        %v656 = vld [vmem:[#allocation2 + $0x8] sm:$0xff]
        %v657 = vld [vmem:[#allocation2 + $0x10] sm:$0xff]
        %v658 = vld [vmem:[#allocation2 + $0x18] sm:$0xff]
        %v659 = vld [vmem:[#allocation2 + $0x20] sm:$0xff]
        %v660 = vld [vmem:[#allocation2 + $0x28] sm:$0xff]
        %v661 = vld [vmem:[#allocation2 + $0x30] sm:$0xff]
        %v662 = vld [vmem:[#allocation2 + $0x38] sm:$0xff]
        %v663 = vadd.f32 %v647, %v655
        %v664 = vadd.f32 %v648, %v656
        %v665 = vadd.f32 %v649, %v657
        %v666 = vadd.f32 %v650, %v658
        %v667 = vadd.f32 %v651, %v659
        %v668 = vadd.f32 %v652, %v660
        %v669 = vadd.f32 %v653, %v661
        %v670 = vadd.f32 %v654, %v662
        %671 = vst [vmem:[%s271] sm:$0xff] %v663
        %672 = vst [vmem:[%s271 + $0x8] sm:$0xff] %v664
        %673 = vst [vmem:[%s271 + $0x10] sm:$0xff] %v665
        %674 = vst [vmem:[%s271 + $0x18] sm:$0xff] %v666
        %675 = vst [vmem:[%s271 + $0x20] sm:$0xff] %v667
        %676 = vst [vmem:[%s271 + $0x28] sm:$0xff] %v668
        %677 = vst [vmem:[%s271 + $0x30] sm:$0xff] %v669
        %678 = vst [vmem:[%s271 + $0x38] sm:$0xff] %v670
        %s679 = sand.u32 %s142, 1
        %s680 = scalar_lea.sflag [#allocation5], %s679
        %s681 = sand.u32 %s142, 1
        %s682 = smul.addr %s681, 64
        %s683 = scalar_lea.vmem [#allocation8], %s682
        // Predicated region
        $region49: #{tpu_custom_call.1} parent=35 // pred_check
          %p684 = pneg %p152
        $region50: #{tpu_custom_call.1} parent=35 // pred_check_branch
          %686 = sbr.rel (%p684) target = $region52
        $region51: #{tpu_custom_call.1} parent=35 // pred_region
          %s687 = smul.u32 8, %s28
          %s689 = ssub.s32 1024, 1024
          %690 = vsyncadd %s680, %s689
          %s691 = smul.addr %s29, 16
          %s692 = sadd.s32 %s687, %s691
          %s693 = smul.addr %s692, 128
          %s694 = scalar_lea.hbm %s4, %s693
          %s696 = sshll.u32 %s683, 4
          %s697 = int_to_ptr.vmem [resolvable:$true] %s696
          %699 = dma.vmem_to_hbm [thread:$0]  %s697, 1024, %s694, %s680
        $region52: #{tpu_custom_call.1} parent=35 // pred_fallthru
          _
      $region36: #{tpu_custom_call.1} parent=5 // pred_fallthru
        _
      %p700 = scmp.le.s32.totalorder 2, %s19
      // Predicated region
      $region53: #{tpu_custom_call.1} parent=5 // pred_check
        %p701 = pneg %p700
      $region54: #{tpu_custom_call.1} parent=5 // pred_check_branch
        %703 = sbr.rel (%p701) target = $region56
      $region55: #{tpu_custom_call.1} parent=5 // pred_region
        %s704 = ssub.s32 %s19, 2
        // Predicated region
        $region57: #{tpu_custom_call.1} parent=55 // pred_check
          %p705 = pneg %p158
        $region58: #{tpu_custom_call.1} parent=55 // pred_check_branch
          %707 = sbr.rel (%p705) target = $region60
        $region59: #{tpu_custom_call.1} parent=55 // pred_region
          %s708 = sand.u32 %s143, 1
          %s709 = scalar_lea.sflag [#allocation5], %s708
          %s710 = sand.u32 %s143, 1
          %s711 = smul.addr %s710, 64
          %s712 = scalar_lea.vmem [#allocation8], %s711
          %713 = dma.done %s709, 1024
        $region60: #{tpu_custom_call.1} parent=55 // pred_fallthru
          _
      $region56: #{tpu_custom_call.1} parent=5 // pred_fallthru
        _
    $region6: #{tpu_custom_call.1} parent=1 // loop_footer
      %s23 = sadd.s32 1, %s19
    $region7: #{tpu_custom_call.1} parent=1 // loop_footer_branch
      %18 = sbr.rel target = $region3
    $region8: #{tpu_custom_call.1} parent=1 // loop_exit
      _
    %714 = vsyncpa [#allocation4], 1
    %s715 = scalar_lea.sflag [#allocation4], 1
    %716 = vsyncpa %s715, 1
    %717 = vsyncpa [#allocation7], 1
    %s718 = scalar_lea.sflag [#allocation7], 1
    %719 = vsyncpa %s718, 1
    %720 = vsyncpa [#allocation5], 1
    %s721 = scalar_lea.sflag [#allocation5], 1
    %722 = vsyncpa %s721, 1

</llo_original>
